<compile_context>
chip_gen: v7x
topology: tpu7x:2x2x1
jax: 0.10.0
libtpu: 0.0.40
codegen_flags: <defaults>
</compile_context>

<pallas_src>
import functools

import jax
import jax.numpy as jnp
from jax.experimental import pallas as pl
from jax.experimental.pallas import tpu as pltpu

LANES = 128
MAX_TILE_ROWS = 4096      # 4096 x 128 f32 = 2 MiB per input block
NUM_SHARDS = 2            # both TCs on v7x; harmless extra outer iter on 1-TC chips


def _round_up(x, m):
    return ((x + m - 1) // m) * m


def _focal_loss_kernel(pred_ref, tgt_ref, out_ref, acc_ref, *,
                       full_rows, rem_lanes, tiles_per_shard, gamma):
    j = pl.program_id(0)          # shard ("parallel")
    i = pl.program_id(1)          # tile within shard ("arbitrary" reduction)

    @pl.when(i == 0)
    def _():
        acc_ref[...] = jnp.zeros_like(acc_ref)

    tile_rows, lanes = pred_ref.shape

    logical_tile = j * tiles_per_shard + i
    row0 = logical_tile * tile_rows

    p = pred_ref[...].astype(jnp.float32)
    t = tgt_ref[...]
    is_one = t == jnp.asarray(1, t.dtype)

    # pt = prediction where target==1 else (1 - prediction)
    pt = jnp.where(is_one, p, 1.0 - p)
    log_pt = jnp.log(pt + 1e-06)

    g = float(gamma)
    if g == 0.0:
        # (1 - pt) ** 0 == 1 exactly (matches torch semantics).
        loss = -log_pt
    else:
        om = 1.0 - pt
        two_g = 2.0 * g
        if two_g == round(two_g) and 0.0 < g <= 8.0:
            # Integer / half-integer gamma via binary exponentiation (+ sqrt):
            # at most 1 extra transcendental per element instead of exp+log pow.
            w = jnp.sqrt(om) if (int(round(two_g)) % 2) else None
            base, e = om, int(g)
            while e > 0:
                if e & 1:
                    w = base if w is None else w * base
                e >>= 1
                if e:
                    base = base * base
            loss = -(w * log_pt)
        else:
            loss = -((om ** g) * log_pt)

    def fold(x):
        # (tile_rows, 128) -> (8, 128): sums whole (8,128) vreg tiles; the
        # reshape does not cross (8,128) tile boundaries so it is free.
        return x.reshape(tile_rows // 8, 8, lanes).sum(axis=0)

    # Only tiles that straddle / exceed the valid element range pay for the
    # mask; interior tiles take the unmasked fast path.
    fully_valid = (row0 + tile_rows) <= full_rows

    @pl.when(fully_valid)
    def _():
        acc_ref[...] += fold(loss)

    @pl.when(jnp.logical_not(fully_valid))
    def _():
        # Row-granular validity (no element-index multiply => no int32 overflow).
        row_ids = row0 + jax.lax.broadcasted_iota(jnp.int32, (tile_rows, lanes), 0)
        col_ids = jax.lax.broadcasted_iota(jnp.int32, (tile_rows, lanes), 1)
        valid = (row_ids < full_rows) | ((row_ids == full_rows) &
                                         (col_ids < rem_lanes))
        # jnp.where (select, not multiply) so garbage in overhanging / OOB
        # block regions cannot poison the sum with NaN/Inf.
        acc_ref[...] += fold(jnp.where(valid, loss, 0.0))

    @pl.when(i == pl.num_programs(1) - 1)
    def _():
        out_ref[0, 0] = jnp.sum(acc_ref[...])


def focal_loss(prediction, target, *, gamma=0.0, size_average=False,
               max_tile_rows=MAX_TILE_ROWS):
    """Pallas implementation of FocalLoss.forward."""
    assert prediction.shape == target.shape
    n = int(prediction.size)

    pred_flat = prediction.reshape(-1)
    tgt_flat = target.reshape(-1)

    # Pad only to a lane (128) multiple. The row count does NOT need to be a
    # multiple of 8 or tile_rows (partial last blocks are masked in-kernel),
    # so any n that is already a multiple of 128 takes the zero-copy path.
    if n % LANES != 0:
        pad = LANES - (n % LANES)
        pred_flat = jnp.pad(pred_flat, (0, pad))
        tgt_flat = jnp.pad(tgt_flat, (0, pad))

    rows = pred_flat.shape[0] // LANES
    pred2 = pred_flat.reshape(rows, LANES)
    tgt2 = tgt_flat.reshape(rows, LANES)

    # Sublane granule depends on the narrowest input dtype (f32:8, bf16:16, i8:32).
    itemsize = min(prediction.dtype.itemsize, target.dtype.itemsize)
    sub_granule = {4: 8, 2: 16, 1: 32}.get(int(itemsize), 8)

    tile_rows = min(_round_up(int(max_tile_rows), sub_granule),
                    _round_up(rows, sub_granule))
    tiles_total = pl.cdiv(rows, tile_rows)
    num_shards = NUM_SHARDS if tiles_total > 1 else 1
    tiles_per_shard = pl.cdiv(tiles_total, num_shards)

    def in_index(j, i):
        tile = j * tiles_per_shard + i
        # Clamp the *physical* tile; logically-OOB duplicates are fully masked.
        return (jnp.minimum(tile, tiles_total - 1), 0)

    in_spec = pl.BlockSpec((tile_rows, LANES), in_index)

    out = pl.pallas_call(
        functools.partial(
            _focal_loss_kernel,
            full_rows=n // LANES,
            rem_lanes=n % LANES,
            tiles_per_shard=tiles_per_shard,
            gamma=float(gamma),
        ),
        out_shape=jax.ShapeDtypeStruct((num_shards, 1), jnp.float32),
        grid_spec=pltpu.PrefetchScalarGridSpec(
            num_scalar_prefetch=0,
            grid=(num_shards, tiles_per_shard),
            in_specs=[in_spec, in_spec],
            out_specs=pl.BlockSpec((1, 1), lambda j, i: (j, 0),
                                   memory_space=pltpu.SMEM),
            scratch_shapes=[pltpu.VMEM((8, LANES), jnp.float32)],
        ),
        # TODO(synk): if an xprof trace on v7x shows one TensorCore idle on the
        # shard axis, switch axis 0 to pltpu.CORE_PARALLEL (or pl.core_map).
        compiler_params=pltpu.CompilerParams(
            dimension_semantics=("parallel", "arbitrary"),
            vmem_limit_bytes=32 * 1024 * 1024,
        ),
    )(pred2, tgt2)

    total = jnp.sum(out)
    if size_average:
        return total / jnp.float32(n)
    return total


def focal_loss_ref(prediction, target, *, gamma=0.0, size_average=False):
    """Pure-JAX reference mirroring the PyTorch module."""
    pt = jnp.where(target == 1.0, prediction, 1.0 - prediction)
    loss = -1.0 * (1.0 - pt) ** gamma * jnp.log(pt + 1e-06)
    return loss.mean() if size_average else loss.sum()


if __name__ == "__main__":
    key = jax.random.PRNGKey(0)
    ok = True

    # (shape, max_tile_rows override): primary NCHW zero-copy single-tile case,
    # a ragged shape (lane pad + masked partial block), a multi-tile/2-shard
    # case with a partial last block, and an odd tile count so shard 1 also
    # exercises the clamped fully-masked duplicate tile.
    test_cases = [
        ((2, 4, 16, 16), None),
        ((1, 3, 11, 7), None),
        ((8, 4, 96, 100), 256),
        ((8, 4, 96, 100), 512),
    ]

    for shape, mtr in test_cases:
        key, k1, k2 = jax.random.split(key, 3)
        prediction = jax.random.uniform(k1, shape, jnp.float32, 0.01, 0.99)
        target = (jax.random.uniform(k2, shape, jnp.float32) > 0.5).astype(
            jnp.float32
        )
        for gamma, size_average in [
            (0.0, False),
            (2.0, False),
            (2.0, True),
            (2.5, False),
            (1.7, False),
        ]:
            kwargs = {} if mtr is None else {"max_tile_rows": mtr}
            got = jax.block_until_ready(
                focal_loss(prediction, target, gamma=gamma,
                           size_average=size_average, **kwargs)
            )
            want = focal_loss_ref(
                prediction, target, gamma=gamma, size_average=size_average
            )
            if not jnp.allclose(got, want, rtol=1e-4, atol=1e-3):
                ok = False
                print(
                    f"MISMATCH shape={shape} mtr={mtr} gamma={gamma} "
                    f"size_average={size_average}: {got} vs {want}"
                )

    # Narrow (int8) target stream: the kernel compares against 1 in-kernel,
    # so no wrapper-side cast (extra HBM pass) is needed.
    key, k1, k2 = jax.random.split(key, 3)
    shape = (2, 4, 16, 16)
    prediction = jax.random.uniform(k1, shape, jnp.float32, 0.01, 0.99)
    target_i8 = (jax.random.uniform(k2, shape, jnp.float32) > 0.5).astype(jnp.int8)
    got = jax.block_until_ready(focal_loss(prediction, target_i8, gamma=2.0))
    want = focal_loss_ref(prediction, target_i8.astype(jnp.float32), gamma=2.0)
    if not jnp.allclose(got, want, rtol=1e-4, atol=1e-3):
        ok = False
        print(f"MISMATCH int8 targets: {got} vs {want}")

    if ok:
        print("KERNEL_OK")
</pallas_src>

<mosaic_0001>
module attributes {stable_mosaic.version = 11 : i64} {
  func.func @_focal_loss_kernel(%arg0: i32, %arg1: i32, %arg2: memref<16x128xf32, #tpu.memory_space<vmem>>, %arg3: memref<16x128xf32, #tpu.memory_space<vmem>>, %arg4: memref<1x1xf32, #tpu.memory_space<smem>>, %arg5: memref<8x128xf32, #tpu.memory_space<vmem>>) attributes {dimension_semantics = [#tpu.dimension_semantics<parallel>, #tpu.dimension_semantics<arbitrary>], iteration_bounds = array<i64: 1, 1>, scalar_prefetch = 0 : i64, scratch_operands = 1 : i64, tpu.core_type = #tpu.core_type<tc>, window_params = [{transform_indices = @transform_0, window_bounds = array<i64: 16, 128>}, {transform_indices = @transform_1, window_bounds = array<i64: 16, 128>}, {transform_indices = @transform_2, window_bounds = array<i64: 1, 1>}]} {
    %c0_i32 = arith.constant 0 : i32
    %0 = arith.cmpi eq, %arg1, %c0_i32 : i32
    %1 = arith.extui %0 : i1 to i32
    %c0_i32_0 = arith.constant 0 : i32
    %2 = arith.cmpi ne, %1, %c0_i32_0 : i32
    scf.if %2 {
      %cst_13 = arith.constant 0.000000e+00 : f32
      %28 = vector.broadcast %cst_13 : f32 to vector<8x128xf32>
      %c0_14 = arith.constant 0 : index
      %c0_15 = arith.constant 0 : index
      %29 = vector.load %arg5[%c0_14, %c0_15] : memref<8x128xf32, #tpu.memory_space<vmem>>, vector<8x128xf32>
      tpu.vector_store %arg5[%c0_14, %c0_15], %28 {strides = array<i32>} : memref<8x128xf32, #tpu.memory_space<vmem>>, vector<8x128xf32>,
    } else {
    }
    %c1_i32 = arith.constant 1 : i32
    %3 = arith.muli %arg0, %c1_i32 : i32
    %4 = arith.addi %3, %arg1 : i32
    %c16_i32 = arith.constant 16 : i32
    %5 = arith.muli %4, %c16_i32 : i32
    %c0 = arith.constant 0 : index
    %c0_1 = arith.constant 0 : index
    %6 = vector.load %arg2[%c0, %c0_1] : memref<16x128xf32, #tpu.memory_space<vmem>>, vector<16x128xf32>
    %c0_2 = arith.constant 0 : index
    %c0_3 = arith.constant 0 : index
    %7 = vector.load %arg3[%c0_2, %c0_3] : memref<16x128xf32, #tpu.memory_space<vmem>>, vector<16x128xf32>
    %cst = arith.constant 1.000000e+00 : f32
    %8 = vector.broadcast %cst : f32 to vector<16x128xf32>
    %9 = arith.cmpf oeq, %7, %8 : vector<16x128xf32>
    %cst_4 = arith.constant 1.000000e+00 : f32
    %10 = vector.broadcast %cst_4 : f32 to vector<16x128xf32>
    %11 = arith.subf %10, %6 : vector<16x128xf32>
    %12 = arith.select %9, %6, %11 : vector<16x128xi1>, vector<16x128xf32>
    %cst_5 = arith.constant 9.99999997E-7 : f32
    %13 = vector.broadcast %cst_5 : f32 to vector<16x128xf32>
    %14 = arith.addf %12, %13 : vector<16x128xf32>
    %15 = math.log %14 : vector<16x128xf32>
    %cst_6 = arith.constant 0.000000e+00 : f32
    %16 = vector.broadcast %cst_6 : f32 to vector<16x128xf32>
    %17 = arith.subf %16, %15 : vector<16x128xf32>
    %c16_i32_7 = arith.constant 16 : i32
    %18 = arith.addi %5, %c16_i32_7 : i32
    %c16_i32_8 = arith.constant 16 : i32
    %19 = arith.cmpi sle, %18, %c16_i32_8 : i32
    %20 = arith.extui %19 : i1 to i32
    %c0_i32_9 = arith.constant 0 : i32
    %21 = arith.cmpi ne, %20, %c0_i32_9 : i32
    scf.if %21 {
      %c0_13 = arith.constant 0 : index
      %c0_14 = arith.constant 0 : index
      %28 = vector.load %arg5[%c0_13, %c0_14] : memref<8x128xf32, #tpu.memory_space<vmem>>, vector<8x128xf32>
      %29 = vector.shape_cast %17 : vector<16x128xf32> to vector<2x8x128xf32>
      %cst_15 = arith.constant dense<0.000000e+00> : vector<8x128xf32>
      %30 = vector.multi_reduction <add>, %29, %cst_15 [0] : vector<2x8x128xf32> to vector<8x128xf32>
      %31 = arith.addf %28, %30 : vector<8x128xf32>
      %c0_16 = arith.constant 0 : index
      %c0_17 = arith.constant 0 : index
      %32 = vector.load %arg5[%c0_16, %c0_17] : memref<8x128xf32, #tpu.memory_space<vmem>>, vector<8x128xf32>
      tpu.vector_store %arg5[%c0_16, %c0_17], %31 {strides = array<i32>} : memref<8x128xf32, #tpu.memory_space<vmem>>, vector<8x128xf32>,
    } else {
    }
    %true = arith.constant true
    %22 = arith.xori %19, %true : i1
    %23 = arith.extui %22 : i1 to i32
    %c0_i32_10 = arith.constant 0 : i32
    %24 = arith.cmpi ne, %23, %c0_i32_10 : i32
    scf.if %24 {
      %28 = tpu.iota {dimensions = array<i32: 0>} : vector<16x128xi32>
      %29 = vector.broadcast %5 : i32 to vector<16x128xi32>
      %30 = arith.addi %29, %28 : vector<16x128xi32>
      %31 = tpu.iota {dimensions = array<i32: 1>} : vector<16x128xi32>
      %c16_i32_13 = arith.constant 16 : i32
      %32 = vector.broadcast %c16_i32_13 : i32 to vector<16x128xi32>
      %33 = arith.cmpi slt, %30, %32 : vector<16x128xi32>
      %c16_i32_14 = arith.constant 16 : i32
      %34 = vector.broadcast %c16_i32_14 : i32 to vector<16x128xi32>
      %35 = arith.cmpi eq, %30, %34 : vector<16x128xi32>
      %c0_i32_15 = arith.constant 0 : i32
      %36 = vector.broadcast %c0_i32_15 : i32 to vector<16x128xi32>
      %37 = arith.cmpi slt, %31, %36 : vector<16x128xi32>
      %38 = arith.andi %35, %37 : vector<16x128xi1>
      %39 = arith.ori %33, %38 : vector<16x128xi1>
      %c0_16 = arith.constant 0 : index
      %c0_17 = arith.constant 0 : index
      %40 = vector.load %arg5[%c0_16, %c0_17] : memref<8x128xf32, #tpu.memory_space<vmem>>, vector<8x128xf32>
      %cst_18 = arith.constant 0.000000e+00 : f32
      %41 = vector.broadcast %cst_18 : f32 to vector<16x128xf32>
      %42 = arith.select %39, %17, %41 : vector<16x128xi1>, vector<16x128xf32>
      %43 = vector.shape_cast %42 : vector<16x128xf32> to vector<2x8x128xf32>
      %cst_19 = arith.constant dense<0.000000e+00> : vector<8x128xf32>
      %44 = vector.multi_reduction <add>, %43, %cst_19 [0] : vector<2x8x128xf32> to vector<8x128xf32>
      %45 = arith.addf %40, %44 : vector<8x128xf32>
      %c0_20 = arith.constant 0 : index
      %c0_21 = arith.constant 0 : index
      %46 = vector.load %arg5[%c0_20, %c0_21] : memref<8x128xf32, #tpu.memory_space<vmem>>, vector<8x128xf32>
      tpu.vector_store %arg5[%c0_20, %c0_21], %45 {strides = array<i32>} : memref<8x128xf32, #tpu.memory_space<vmem>>, vector<8x128xf32>,
    } else {
    }
    %c0_i32_11 = arith.constant 0 : i32
    %25 = arith.cmpi eq, %arg1, %c0_i32_11 : i32
    %26 = arith.extui %25 : i1 to i32
    %c0_i32_12 = arith.constant 0 : i32
    %27 = arith.cmpi ne, %26, %c0_i32_12 : i32
    scf.if %27 {
      %c0_13 = arith.constant 0 : index
      %c0_14 = arith.constant 0 : index
      %28 = vector.load %arg5[%c0_13, %c0_14] : memref<8x128xf32, #tpu.memory_space<vmem>>, vector<8x128xf32>
      %29 = vector.shape_cast %28 : vector<8x128xf32> to vector<1x8x128xf32>
      %cst_15 = arith.constant dense<0.000000e+00> : vector<1xf32>
      %30 = vector.multi_reduction <add>, %29, %cst_15 [1, 2] : vector<1x8x128xf32> to vector<1xf32>
      %31 = vector.shape_cast %30 : vector<1xf32> to vector<1x1x1xf32>
      %32 = vector.extract %31[0, 0, 0] : f32 from vector<1x1x1xf32>
      %c0_16 = arith.constant 0 : index
      %c0_17 = arith.constant 0 : index
      %33 = memref.load %arg4[%c0_16, %c0_17] : memref<1x1xf32, #tpu.memory_space<smem>>
      memref.store %32, %arg4[%c0_16, %c0_17] : memref<1x1xf32, #tpu.memory_space<smem>>
    } else {
    }
    return
  }
  func.func @transform_0(%arg0: i32, %arg1: i32) -> (i32, i32) {
    %c1_i32 = arith.constant 1 : i32
    %0 = arith.muli %arg0, %c1_i32 : i32
    %1 = arith.addi %0, %arg1 : i32
    %c0_i32 = arith.constant 0 : i32
    %2 = arith.minsi %1, %c0_i32 : i32
    %c0_i32_0 = arith.constant 0 : i32
    %c0_i32_1 = arith.constant 0 : i32
    return %2, %c0_i32_0 : i32, i32
  }
  func.func @transform_1(%arg0: i32, %arg1: i32) -> (i32, i32) {
    %c1_i32 = arith.constant 1 : i32
    %0 = arith.muli %arg0, %c1_i32 : i32
    %1 = arith.addi %0, %arg1 : i32
    %c0_i32 = arith.constant 0 : i32
    %2 = arith.minsi %1, %c0_i32 : i32
    %c0_i32_0 = arith.constant 0 : i32
    %c0_i32_1 = arith.constant 0 : i32
    return %2, %c0_i32_0 : i32, i32
  }
  func.func @transform_2(%arg0: i32, %arg1: i32) -> (i32, i32) {
    %c0_i32 = arith.constant 0 : i32
    %c0_i32_0 = arith.constant 0 : i32
    return %arg0, %c0_i32 : i32, i32
  }
}

</mosaic_0001>

<llo_original>
// kernel: tpu_custom_call.1
$region0: #{tpu_custom_call.1}
  #allocation0 [shape = 'u32[]', space=smem, size = 0x4, offset = 0x4, fixed_abs, tag = 'smem constant byte address 0x4 - core index']
  #allocation1 [shape = 'u32[144,128]{1,0:T(1,128)}', space=vmem, size = 0x12000, scoped, tag = 'internal scratch']
  #allocation2 [shape = 'f32[8,128]{1,0:T(8,128)}', space=vmem, size = 0x1000, scoped, tag = 'scratch operand']
  %s0 = inlined_call_operand.hbm [shape: f32[16,128], index: 0, kind: input, shape index: {}]
  %s1 = inlined_call_operand.hbm [shape: f32[16,128], index: 1, kind: input, shape index: {}]
  %s2 = inlined_call_operand.hbm [shape: f32[1,1], index: 2, kind: output, shape index: {}]
  %s3 = sld [smem:[#allocation0]]
  $region42: #{tpu_custom_call.1} parent=0
    _
  %s5 = ssub.s32 1, %s3
  %s6 = scalar_select 0, %s5, %s3
  $region1: #{tpu_custom_call.1} parent=0
    #allocation3 [shape = 'u8[8192]{0}', space=vmem, size = 0x2000, scoped, tag = 'input window, operand 0, single buffered']
    #allocation4 [shape = 's32[1]{0}', space=sflag, size = 0x4, scoped, tag = 'scoped memory for tpu_custom_call.1']
    #allocation5 [shape = 's32[1]{0}', space=sflag, size = 0x4, scoped, tag = 'scoped memory for tpu_custom_call.1']
    #allocation6 [shape = 'u8[8192]{0}', space=vmem, size = 0x2000, scoped, tag = 'input window, operand 1, single buffered']
    #allocation7 [shape = 's32[1]{0}', space=sflag, size = 0x4, scoped, tag = 'scoped memory for tpu_custom_call.1']
    #allocation8 [shape = 'u8[512]{0}', space=smem, size = 0x200, scoped, tag = 'output window, operand 0, single buffered']
    %7 = vsyncpa [#allocation4], 0
    %8 = vsyncpa [#allocation7], 0
    %9 = vsyncpa [#allocation5], 0
    // Predicated region
    $region2: #{tpu_custom_call.1} parent=1 // pred_check
      _
    $region3: #{tpu_custom_call.1} parent=1 // pred_check_branch
      %11 = sbr.rel (0) target = $region5
    $region4: #{tpu_custom_call.1} parent=1 // pred_region
      %s12 = sadd.s32 0, 0
      %p13 = scmp.lt.s32.totalorder %s12, 0
      %s14 = scalar_select %p13, %s12, 0
      %s15 = smul.u32 2, %s14
      %s17 = ssub.s32 256, 256
      %18 = vsyncadd [#allocation4], %s17
      %s19 = smul.addr %s15, 128
      %s20 = scalar_lea.hbm %s0, %s19
      %s21 = sshll.u32 [#allocation3], 4
      %s22 = int_to_ptr.vmem [resolvable:$true] %s21
      %27 = dma.hbm_to_vmem [thread:$0]  %s20, 256, %s22, [#allocation4], 128, 128, 8
    $region5: #{tpu_custom_call.1} parent=1 // pred_fallthru
      _
    // Predicated region
    $region6: #{tpu_custom_call.1} parent=1 // pred_check
      _
    $region7: #{tpu_custom_call.1} parent=1 // pred_check_branch
      %29 = sbr.rel (0) target = $region9
    $region8: #{tpu_custom_call.1} parent=1 // pred_region
      %s30 = sadd.s32 0, 0
      %p31 = scmp.lt.s32.totalorder %s30, 0
      %s32 = scalar_select %p31, %s30, 0
      %s33 = smul.u32 2, %s32
      %s35 = ssub.s32 256, 256
      %36 = vsyncadd [#allocation7], %s35
      %s37 = smul.addr %s33, 128
      %s38 = scalar_lea.hbm %s1, %s37
      %s39 = sshll.u32 [#allocation6], 4
      %s40 = int_to_ptr.vmem [resolvable:$true] %s39
      %45 = dma.hbm_to_vmem [thread:$0]  %s38, 256, %s40, [#allocation7], 128, 128, 8
    $region9: #{tpu_custom_call.1} parent=1 // pred_fallthru
      _
    // Predicated region
    $region10: #{tpu_custom_call.1} parent=1 // pred_check
      _
    $region11: #{tpu_custom_call.1} parent=1 // pred_check_branch
      %47 = sbr.rel (0) target = $region13
    $region12: #{tpu_custom_call.1} parent=1 // pred_region
      %48 = dma.done [#allocation4], 256
    $region13: #{tpu_custom_call.1} parent=1 // pred_fallthru
      _
    // Predicated region
    $region14: #{tpu_custom_call.1} parent=1 // pred_check
      _
    $region15: #{tpu_custom_call.1} parent=1 // pred_check_branch
      %50 = sbr.rel (0) target = $region17
    $region16: #{tpu_custom_call.1} parent=1 // pred_region
      %51 = dma.done [#allocation7], 256
    $region17: #{tpu_custom_call.1} parent=1 // pred_fallthru
      _
    %s52 = sadd.s32 0, 0
    %p53 = scmp.lt.s32.totalorder %s52, 0
    %s54 = scalar_select %p53, %s52, 0
    %s55 = smul.u32 2, %s54
    %s56 = sadd.s32 0, 0
    %p57 = scmp.lt.s32.totalorder %s56, 0
    %s58 = scalar_select %p57, %s56, 0
    %s59 = smul.u32 2, %s58
    %p60 = scmp.eq.s32.totalorder 0, 0
    // Predicated region
    $region18: #{tpu_custom_call.1} parent=1 // pred_check
      %p61 = pneg %p60
    $region19: #{tpu_custom_call.1} parent=1 // pred_check_branch
      %63 = sbr.rel (%p61) target = $region21
    $region20: #{tpu_custom_call.1} parent=1 // pred_region
      %64 = vst [vmem:[#allocation2] sm:$0xff] 0.0
    $region21: #{tpu_custom_call.1} parent=1 // pred_fallthru
      _
    %s65 = sadd.s32 0, 0
    %s66 = smul.u32 %s65, 16
    %v67 = vld [vmem:[#allocation3] sm:$0xff]
    %v68 = vld [vmem:[#allocation3 + $0x8] sm:$0xff]
    %v69 = vld [vmem:[#allocation6] sm:$0xff]
    %v70 = vld [vmem:[#allocation6 + $0x8] sm:$0xff]
    %vm71 = vcmp.eq.f32.partialorder %v69, 1.0
    %vm72 = vcmp.eq.f32.partialorder %v70, 1.0
    %v73 = vsub.f32 1.0, %v67
    %v74 = vsub.f32 1.0, %v68
    %v75 = vsel %vm71, %v67, %v73
    %v76 = vsel %vm72, %v68, %v74
    %v77 = vadd.f32 %v75, 1e-06
    %v78 = vadd.f32 %v76, 1e-06
    %v79 = vlog2.pop %v77
    %v80 = vmul.f32 %v79, 0.6931472
    %v81 = vlog2.pop %v78
    %v82 = vmul.f32 %v81, 0.6931472
    %v83 = vsub.f32 0.0, %v80
    %v84 = vsub.f32 0.0, %v82
    %s85 = sadd.s32 %s66, 16
    %p86 = scmp.le.s32.totalorder %s85, 16
    // Predicated region
    $region22: #{tpu_custom_call.1} parent=1 // pred_check
      %p87 = pneg %p86
    $region23: #{tpu_custom_call.1} parent=1 // pred_check_branch
      %89 = sbr.rel (%p87) target = $region25
    $region24: #{tpu_custom_call.1} parent=1 // pred_region
      %v90 = vld [vmem:[#allocation2] sm:$0xff]
      %v91 = vadd.f32 %v83, %v84
      %v92 = vadd.f32 %v90, %v91
      %93 = vst [vmem:[#allocation2] sm:$0xff] %v92
    $region25: #{tpu_custom_call.1} parent=1 // pred_fallthru
      _
    %p94 = scmp.gt.s32.totalorder %s85, 16
    // Predicated region
    $region26: #{tpu_custom_call.1} parent=1 // pred_check
      %p95 = pneg %p94
    $region27: #{tpu_custom_call.1} parent=1 // pred_check_branch
      %97 = sbr.rel (%p95) target = $region29
    $region28: #{tpu_custom_call.1} parent=1 // pred_region
      %v98 = vlaneseq
      %v99 = vshrl.u32 %v98, 7
      %v100 = vadd.s32 %v99, 8
      %v101 = vstv %s66
      %v102 = vadd.s32 %v101, %v99
      %v103 = vadd.s32 %v101, %v100
      %v104 = vlaneseq
      %v105 = vand.u32 %v104, 127
      %vm106 = vcmp.lt.s32.totalorder %v102, 16
      %vm107 = vcmp.lt.s32.totalorder %v103, 16
      %vm108 = vcmp.eq.s32.totalorder %v102, 16
      %vm109 = vcmp.eq.s32.totalorder %v103, 16
      %vm110 = vcmp.lt.s32.totalorder %v105, 0
      %vm111 = vmand %vm108, %vm110
      %vm112 = vmand %vm109, %vm110
      %vm113 = vmor %vm106, %vm111
      %vm114 = vmor %vm107, %vm112
      %v115 = vld [vmem:[#allocation2] sm:$0xff]
      %v116 = vsel %vm113, %v83, 0.0
      %v117 = vsel %vm114, %v84, 0.0
      %v118 = vadd.f32 %v116, %v117
      %v119 = vadd.f32 %v115, %v118
      %120 = vst [vmem:[#allocation2] sm:$0xff] %v119
    $region29: #{tpu_custom_call.1} parent=1 // pred_fallthru
      _
    // Predicated region
    $region30: #{tpu_custom_call.1} parent=1 // pred_check
      %p121 = pneg %p60
    $region31: #{tpu_custom_call.1} parent=1 // pred_check_branch
      %123 = sbr.rel (%p121) target = $region33
    $region32: #{tpu_custom_call.1} parent=1 // pred_region
      %v124 = vld [vmem:[#allocation2] sm:$0xff]
      %125 = vadd.xlane.f32.xlu0 %v124
      %v126 = vpop.xlane.xlu0 %125
      %v127 = vrot.slane %v126, 4
      %v128 = vadd.f32 %v126, %v127
      %v129 = vrot.slane %v128, 2
      %v130 = vadd.f32 %v128, %v129
      %v131 = vrot.slane %v130, 1
      %v132 = vadd.f32 %v130, %v131
      %s133 = vtos %v132
      %s134 = scalar_lea.smem [#allocation8], 0
      %135 = sst [smem:[%s134]] %s133
    $region33: #{tpu_custom_call.1} parent=1 // pred_fallthru
      _
    // Predicated region
    $region34: #{tpu_custom_call.1} parent=1 // pred_check
      _
    $region35: #{tpu_custom_call.1} parent=1 // pred_check_branch
      %137 = sbr.rel (0) target = $region37
    $region36: #{tpu_custom_call.1} parent=1 // pred_region
      %s139 = ssub.s32 16, 16
      %140 = vsyncadd [#allocation5], %s139
      %143 = dma.smem_to_hbm [#allocation8], 16, %s2, [#allocation5]
    $region37: #{tpu_custom_call.1} parent=1 // pred_fallthru
      _
    // Predicated region
    $region38: #{tpu_custom_call.1} parent=1 // pred_check
      _
    $region39: #{tpu_custom_call.1} parent=1 // pred_check_branch
      %145 = sbr.rel (0) target = $region41
    $region40: #{tpu_custom_call.1} parent=1 // pred_region
      %146 = dma.done [#allocation5], 16
    $region41: #{tpu_custom_call.1} parent=1 // pred_fallthru
      _
    %147 = sfence
    %148 = vsyncpa [#allocation4], 1
    %149 = vsyncpa [#allocation7], 1
    %150 = vsyncpa [#allocation5], 1

</llo_original>
